<compile_context>
chip_gen: v7x
topology: tpu7x:2x2x1
jax: 0.10.0
libtpu: 0.0.40
codegen_flags: <defaults>
</compile_context>

<pallas_src>
import jax
import jax.numpy as jnp
from jax.experimental import pallas as pl
from jax.experimental.pallas import tpu as pltpu

_LANES = 128                      # vreg lane width
_MAX_LANES = 2048                 # cap on lane-dense width
_MAX_TILE_BYTES = 4 * 1024 * 1024  # keep 4 double-buffered tiles well inside
                                   # v7x's 32 MiB scoped-VMEM default


def _ae_identity_kernel(x_ref, o_ref):
    # encoder -> fc1 -> decoder are all empty nn.Sequential() == identity.
    # TODO(synk): when real conv/FC weights are added, replace this copy with
    # MXU-tiled stages (per-stage (tm,tk)/(tk,tn) BlockSpecs, K-last grid,
    # f32 VMEM accumulator with pl.when init/finalize).
    o_ref[...] = x_ref[...]


def _pick_layout(total, itemsize):
    """Choose a lane-dense (rows, lanes) view and a row tile size."""
    if total % _LANES != 0:
        return None
    lanes = _LANES
    # Widen the lane axis (bigger multiple of 128 => fewer, denser rows).
    while (lanes < _MAX_LANES
           and total % (lanes * 2) == 0
           and (total // (lanes * 2)) >= 8):
        lanes *= 2
    rows = total // lanes
    # Largest row tile that (a) is a multiple of 8, (b) divides rows exactly,
    # (c) keeps each tile <= _MAX_TILE_BYTES.  Fall back to full extent.
    cap = max(8, (_MAX_TILE_BYTES // (lanes * itemsize)) // 8 * 8)
    tile_r = rows
    for cand in (2048, 1024, 512, 256, 128, 64, 32, 16, 8):
        if cand <= cap and cand <= rows and rows % cand == 0:
            tile_r = cand
            break
    return rows, lanes, tile_r


@jax.jit
def appearance_autoencoder_forward(x):
    """Forward pass of appearance_autoencoder: x -> x_recon (== x).

    NOTE: since encoder/fc1/decoder are empty, the truly optimal version is
    `return x`; the pallas_call is retained as a placeholder for the future
    (weighted) encoder/decoder stages.
    """
    orig_shape = x.shape
    total = x.size
    itemsize = jnp.dtype(x.dtype).itemsize

    layout = _pick_layout(total, itemsize)
    if layout is None:
        # Fallback: full-array 2-D block (full-extent dims sidestep the
        # (8,128) divisibility rule); only hit when total % 128 != 0.
        lanes = orig_shape[-1]
        rows = total // lanes
        tile_r = rows
    else:
        rows, lanes, tile_r = layout

    x2d = x.reshape(rows, lanes)
    grid = (rows // tile_r,)

    out2d = pl.pallas_call(
        _ae_identity_kernel,
        out_shape=jax.ShapeDtypeStruct((rows, lanes), x2d.dtype),
        grid=grid,
        in_specs=[pl.BlockSpec((tile_r, lanes), lambda i: (i, 0))],
        out_specs=pl.BlockSpec((tile_r, lanes), lambda i: (i, 0)),
        input_output_aliases={0: 0},
        compiler_params=pltpu.CompilerParams(
            dimension_semantics=("parallel",)),
    )(x2d)

    return out2d.reshape(orig_shape)


if __name__ == "__main__":
    key = jax.random.PRNGKey(0)
    # Small NCHW input consistent with an image-appearance autoencoder.
    x = jax.random.normal(key, (2, 4, 16, 16), dtype=jnp.float32)

    x_recon = appearance_autoencoder_forward(x)
    jax.block_until_ready(x_recon)

    # Semantics check: empty encoder/fc1/decoder => exact reconstruction.
    assert x_recon.shape == x.shape
    assert x_recon.dtype == x.dtype
    assert bool(jnp.all(x_recon == x))

    print("KERNEL_OK")
</pallas_src>

<mosaic_0001>
module attributes {stable_mosaic.version = 11 : i64} {
  func.func @_ae_identity_kernel(%arg0: i32, %arg1: memref<8x256xf32, #tpu.memory_space<vmem>>, %arg2: memref<8x256xf32, #tpu.memory_space<vmem>>) attributes {dimension_semantics = [#tpu.dimension_semantics<parallel>], iteration_bounds = array<i64: 1>, scalar_prefetch = 0 : i64, scratch_operands = 0 : i64, tpu.core_type = #tpu.core_type<tc>, window_params = [{transform_indices = @transform_0, window_bounds = array<i64: 8, 256>}, {transform_indices = @transform_1, window_bounds = array<i64: 8, 256>}]} {
    %c0 = arith.constant 0 : index
    %c0_0 = arith.constant 0 : index
    %0 = vector.load %arg1[%c0, %c0_0] : memref<8x256xf32, #tpu.memory_space<vmem>>, vector<8x256xf32>
    %c0_1 = arith.constant 0 : index
    %c0_2 = arith.constant 0 : index
    %1 = vector.load %arg2[%c0_1, %c0_2] : memref<8x256xf32, #tpu.memory_space<vmem>>, vector<8x256xf32>
    tpu.vector_store %arg2[%c0_1, %c0_2], %0 {strides = array<i32>} : memref<8x256xf32, #tpu.memory_space<vmem>>, vector<8x256xf32>,
    return
  }
  func.func @transform_0(%arg0: i32) -> (i32, i32) {
    %c0_i32 = arith.constant 0 : i32
    %c0_i32_0 = arith.constant 0 : i32
    return %arg0, %c0_i32 : i32, i32
  }
  func.func @transform_1(%arg0: i32) -> (i32, i32) {
    %c0_i32 = arith.constant 0 : i32
    %c0_i32_0 = arith.constant 0 : i32
    return %arg0, %c0_i32 : i32, i32
  }
}

</mosaic_0001>

<llo_original>
// kernel: appearance_autoencoder_forward.1
$region0: #{appearance_autoencoder_forward.1}
  #allocation0 [shape = 'u32[]', space=smem, size = 0x4, offset = 0x4, fixed_abs, tag = 'smem constant byte address 0x4 - core index']
  #allocation1 [shape = 'u32[144,128]{1,0:T(1,128)}', space=vmem, size = 0x12000, scoped, tag = 'internal scratch']
  %s0 = inlined_call_operand.vmem [shape: f32[8,256], index: 0, kind: input, shape index: {}, may-alias: {0,1}]
  %s1 = inlined_call_operand.vmem [shape: f32[8,256], index: 1, kind: output, shape index: {}, may-alias: {0,1}]
  %s2 = sld [smem:[#allocation0]]
  $region14: #{appearance_autoencoder_forward.1} parent=0
    _
  %s4 = ssub.s32 1, %s2
  %s5 = scalar_select 0, %s4, %s2
  // Predicated region
  $region2: #{appearance_autoencoder_forward.1} parent=0 // pred_check
    _
  $region3: #{appearance_autoencoder_forward.1} parent=0 // pred_check_branch
    %7 = sbr.rel (0) target = $region5
  $region4: #{appearance_autoencoder_forward.1} parent=0 // pred_region
    _
  $region5: #{appearance_autoencoder_forward.1} parent=0 // pred_fallthru
    _
  %v8 = vld [vmem:[%s0] sm:$0xff]
  %v9 = vld [vmem:[%s0 + $0x8] sm:$0xff]
  %10 = vst [vmem:[%s1] sm:$0xff] %v8
  %11 = vst [vmem:[%s1 + $0x8] sm:$0xff] %v9
  // Predicated region
  $region6: #{appearance_autoencoder_forward.1} parent=0 // pred_check
    _
  $region7: #{appearance_autoencoder_forward.1} parent=0 // pred_check_branch
    %13 = sbr.rel (0) target = $region9
  $region8: #{appearance_autoencoder_forward.1} parent=0 // pred_region
    _
  $region9: #{appearance_autoencoder_forward.1} parent=0 // pred_fallthru
    _
  // Predicated region
  $region10: #{appearance_autoencoder_forward.1} parent=0 // pred_check
    _
  $region11: #{appearance_autoencoder_forward.1} parent=0 // pred_check_branch
    %15 = sbr.rel (0) target = $region13
  $region12: #{appearance_autoencoder_forward.1} parent=0 // pred_region
    _
  $region13: #{appearance_autoencoder_forward.1} parent=0 // pred_fallthru
    _

</llo_original>
